<compile_context>
chip_gen: v6e
topology: v6e:2x2x1
jax: 0.10.0
libtpu: 0.0.40
codegen_flags: <defaults>
</compile_context>

<pallas_src>
import functools
import math

import jax
import jax.numpy as jnp
from jax.experimental import pallas as pl
from jax.experimental.pallas import tpu as pltpu


def make_pos_encoding(seq_len: int, d_model: int) -> jnp.ndarray:
    """Replicates the PyTorch __init__ buffer exactly (quirk kept). Shape (1, S, D), f32."""
    pos = jnp.arange(seq_len, dtype=jnp.float32)[:, None]                # (S, 1)
    i = jnp.arange(d_model, dtype=jnp.int32)[None, :]                    # (1, D)
    exponent = ((2 * i) // 2).astype(jnp.float32) / float(d_model)       # == i / d_model
    angles = pos / jnp.power(jnp.float32(10000.0), exponent)             # (S, D)
    even = (jnp.arange(d_model) % 2 == 0)[None, :]
    pos_enc = jnp.where(even, jnp.sin(angles), jnp.cos(angles))
    return pos_enc[None, :, :].astype(jnp.float32)                       # (1, S, D)


def _pe_block(row_block_idx, d_model: int, row_tile: int) -> jnp.ndarray:
    """PE values for one (row_tile, 128) tile of the flattened (seq*d_model) axis.

    Flat index f = s*d_model + d; angle = s / 10000**(d/d_model) (quirk kept);
    even d -> sin, odd d -> cos.  Returned as float32, shape (row_tile, 128).
    """
    rows = jax.lax.broadcasted_iota(jnp.int32, (row_tile, 128), 0)
    lanes = jax.lax.broadcasted_iota(jnp.int32, (row_tile, 128), 1)
    f = (row_block_idx * row_tile + rows) * 128 + lanes                   # global flat idx
    if d_model & (d_model - 1) == 0:            # power-of-two: shift/mask, no int div
        shift = int(d_model).bit_length() - 1
        s = f >> shift
        d = f & (d_model - 1)
    else:                                        # generic path (non-negative ints)
        s = f // d_model
        d = f - s * d_model
    inv_freq = jnp.exp(d.astype(jnp.float32) *
                       jnp.float32(-math.log(10000.0) / d_model))
    angle = s.astype(jnp.float32) * inv_freq
    return jnp.where((d & 1) == 0, jnp.sin(angle), jnp.cos(angle))


def _add_pe_generate_kernel(x_ref, o_ref, *, d_model: int, row_tile: int):
    # Blocks: (Bt, row_tile, 128).  grid = (row_tiles, batch_tiles).
    pe = _pe_block(pl.program_id(0), d_model, row_tile)                   # (row_tile, 128) f32
    o_ref[...] = x_ref[...] + pe[None, :, :].astype(o_ref.dtype)


def _add_pe_streamed_kernel(x_ref, pe_ref, o_ref):
    # x/out blocks (Bt, row_tile, 128); pe block (1, row_tile, 128), f32 -> cast in-kernel.
    o_ref[...] = x_ref[...] + pe_ref[...].astype(o_ref.dtype)


def _largest_divisor(n: int, cap: int, step: int = 1) -> int:
    """Largest multiple of `step` that divides n and is <= cap (0 if none)."""
    best, t = 0, step
    while t <= min(n, cap):
        if n % t == 0:
            best = t
        t += step
    return best


def _choose_tiling(batch: int, n_rows: int, itemsize: int,
                   target_block_bytes: int, pe_rows_cap: int = 4096):
    """Pick (Bt, grid_b, row_tile, grid_r) for dense (Bt, row_tile, 128) blocks."""
    bytes_per_row = 128 * itemsize
    cap_rows = max(8, min(pe_rows_cap, target_block_bytes // bytes_per_row))

    if n_rows <= cap_rows:
        row_tile, grid_r = n_rows, 1                       # whole row axis per step
    else:
        row_tile = _largest_divisor(n_rows, cap_rows, 8)   # exact multiple-of-8 divisor
        if row_tile:
            grid_r = n_rows // row_tile
        else:                                              # no clean divisor: ragged tail
            row_tile = (cap_rows // 8) * 8
            grid_r = pl.cdiv(n_rows, row_tile)

    bt_cap = max(1, target_block_bytes // max(1, row_tile * bytes_per_row))
    bt = _largest_divisor(batch, bt_cap, 1) or 1
    grid_b = batch // bt

    # v7x has two TensorCores: avoid a degenerate single-step grid when splittable.
    if grid_r * grid_b == 1:
        if batch >= 2:
            bt = _largest_divisor(batch, batch // 2, 1) or 1
            grid_b = batch // bt
        elif n_rows >= 16 and n_rows % 8 == 0:
            half = _largest_divisor(n_rows, n_rows // 2, 8)
            if half:
                row_tile, grid_r = half, n_rows // half
    return bt, grid_b, row_tile, grid_r


def positional_encoding_forward(
    x: jnp.ndarray,
    pos_enc: jnp.ndarray,
    *,
    target_block_bytes: int = 4 * 1024 * 1024,   # per-stream block cap
    min_pallas_elems: int = 64 * 1024,           # below this, let XLA fuse the add
    generate_pe_in_kernel: bool = True,          # False -> stream the PE table instead
) -> jnp.ndarray:
    """x: (B, S, D); pos_enc: (1, S, D) buffer.  Returns x + pos_enc (broadcast over batch)."""
    B, S, D = x.shape
    assert pos_enc.shape == (1, S, D), "pos_encoding buffer must match x's (seq, d_model)"

    flat = S * D
    # Tiny problems or lane-ragged shapes: plain add (XLA fuses it with neighbours).
    # TODO(synk): pad `flat` to a 128-multiple instead of falling back when S*D % 128 != 0.
    if B * flat < min_pallas_elems or flat % 128 != 0:
        return x + pos_enc.astype(x.dtype)

    n_rows = flat // 128
    x2 = x.reshape(B, n_rows, 128)               # lane+sublane dense 2-D view per batch

    bt, grid_b, row_tile, grid_r = _choose_tiling(
        B, n_rows, jnp.dtype(x.dtype).itemsize, target_block_bytes)

    x_spec = pl.BlockSpec((bt, row_tile, 128), lambda r, b: (b, r, 0))
    out_spec = pl.BlockSpec((bt, row_tile, 128), lambda r, b: (b, r, 0))

    if generate_pe_in_kernel:
        kernel = functools.partial(_add_pe_generate_kernel, d_model=D, row_tile=row_tile)
        in_specs = [x_spec]
        operands = (x2,)
    else:
        # Fallback: stream the f32 buffer; batch is the inner grid axis so the PE
        # block stays resident across it (fetched once per row tile).
        kernel = _add_pe_streamed_kernel
        in_specs = [x_spec, pl.BlockSpec((1, row_tile, 128), lambda r, b: (0, r, 0))]
        operands = (x2, pos_enc.reshape(1, n_rows, 128))

    out2 = pl.pallas_call(
        kernel,
        out_shape=jax.ShapeDtypeStruct((B, n_rows, 128), x.dtype),
        grid_spec=pltpu.PrefetchScalarGridSpec(
            num_scalar_prefetch=0,
            grid=(grid_r, grid_b),
            in_specs=in_specs,
            out_specs=out_spec,
        ),
        compiler_params=pltpu.CompilerParams(
            dimension_semantics=("parallel", "parallel"),
            vmem_limit_bytes=48 * 1024 * 1024,   # 2-3 streams x 2 bufs x <=4 MiB + temps
        ),
        input_output_aliases={0: 0},             # write result over x's buffer (donate x!)
    )(*operands)

    return out2.reshape(B, S, D)


if __name__ == "__main__":
    # Small shapes implied by the forward: x is (batch, seq_len, d_model).
    batch, seq_len, d_model = 2, 8, 32

    key = jax.random.PRNGKey(0)
    x = jax.random.normal(key, (batch, seq_len, d_model), dtype=jnp.float32)
    pos_enc = make_pos_encoding(seq_len, d_model)      # the registered buffer

    ref = x + pos_enc                                  # reference, computed up-front

    fwd = jax.jit(
        positional_encoding_forward,
        static_argnames=("target_block_bytes", "min_pallas_elems", "generate_pe_in_kernel"),
        donate_argnums=(0,),                           # makes input_output_aliases real
    )

    def run(x_in, **kw):
        # Donate a fresh copy so the originals stay valid for reference checks.
        return jax.block_until_ready(fwd(jnp.array(x_in, copy=True), pos_enc, **kw))

    # 1) Primary Pallas path: PE generated in-kernel (forced on at the tiny demo shape).
    #    If transcendental lowering is unavailable, fall back to the streamed-PE kernel.
    gen_ok = True
    try:
        out = run(x, min_pallas_elems=0)
    except Exception:
        gen_ok = False
        out = run(x, min_pallas_elems=0, generate_pe_in_kernel=False)
    assert out.shape == (batch, seq_len, d_model)
    assert jnp.allclose(out, ref, atol=1e-4), "pallas f32 mismatch vs reference"

    # 2) bf16 path: add and output stay bf16 (documented deviation from torch promotion).
    x_bf16 = x.astype(jnp.bfloat16)
    out_bf16 = run(x_bf16, min_pallas_elems=0, generate_pe_in_kernel=gen_ok)
    ref_bf16 = x_bf16 + pos_enc.astype(jnp.bfloat16)
    assert out_bf16.dtype == jnp.bfloat16
    assert jnp.allclose(out_bf16.astype(jnp.float32),
                        ref_bf16.astype(jnp.float32), atol=5e-2), "bf16 mismatch"

    # 3) Small-shape fallback (default threshold -> plain fused XLA add).
    out_small = run(x)
    assert jnp.allclose(out_small, ref, atol=1e-6), "fallback mismatch"

    print("KERNEL_OK")
</pallas_src>

<mosaic_0001>
module attributes {stable_mosaic.version = 11 : i64} {
  func.func @_add_pe_generate_kernel(%arg0: i32, %arg1: i32, %arg2: memref<1x2x128xf32, #tpu.memory_space<vmem>>, %arg3: memref<1x2x128xf32, #tpu.memory_space<vmem>>) attributes {dimension_semantics = [#tpu.dimension_semantics<parallel>, #tpu.dimension_semantics<parallel>], iteration_bounds = array<i64: 1, 2>, scalar_prefetch = 0 : i64, scratch_operands = 0 : i64, tpu.core_type = #tpu.core_type<tc>, window_params = [{transform_indices = @transform_0, window_bounds = array<i64: 1, 2, 128>}, {transform_indices = @transform_1, window_bounds = array<i64: 1, 2, 128>}]} {
    %0 = tpu.iota {dimensions = array<i32: 0>} : vector<2x128xi32>
    %1 = tpu.iota {dimensions = array<i32: 1>} : vector<2x128xi32>
    %c2_i32 = arith.constant 2 : i32
    %2 = arith.muli %arg0, %c2_i32 : i32
    %3 = vector.broadcast %2 : i32 to vector<2x128xi32>
    %4 = arith.addi %3, %0 : vector<2x128xi32>
    %c128_i32 = arith.constant 128 : i32
    %5 = vector.broadcast %c128_i32 : i32 to vector<2x128xi32>
    %6 = arith.muli %4, %5 : vector<2x128xi32>
    %7 = arith.addi %6, %1 : vector<2x128xi32>
    %c5_i32 = arith.constant 5 : i32
    %8 = vector.broadcast %c5_i32 : i32 to vector<2x128xi32>
    %9 = arith.shrsi %7, %8 : vector<2x128xi32>
    %c31_i32 = arith.constant 31 : i32
    %10 = vector.broadcast %c31_i32 : i32 to vector<2x128xi32>
    %11 = arith.andi %7, %10 : vector<2x128xi32>
    %12 = arith.sitofp %11 : vector<2x128xi32> to vector<2x128xf32>
    %cst = arith.constant -0.287823141 : f32
    %13 = vector.broadcast %cst : f32 to vector<2x128xf32>
    %14 = arith.mulf %12, %13 : vector<2x128xf32>
    %15 = math.exp %14 : vector<2x128xf32>
    %16 = arith.sitofp %9 : vector<2x128xi32> to vector<2x128xf32>
    %17 = arith.mulf %16, %15 : vector<2x128xf32>
    %c1_i32 = arith.constant 1 : i32
    %18 = vector.broadcast %c1_i32 : i32 to vector<2x128xi32>
    %19 = arith.andi %11, %18 : vector<2x128xi32>
    %c0_i32 = arith.constant 0 : i32
    %20 = vector.broadcast %c0_i32 : i32 to vector<2x128xi32>
    %21 = arith.cmpi eq, %19, %20 : vector<2x128xi32>
    %22 = math.sin %17 : vector<2x128xf32>
    %23 = math.cos %17 : vector<2x128xf32>
    %24 = arith.select %21, %22, %23 : vector<2x128xi1>, vector<2x128xf32>
    %c0 = arith.constant 0 : index
    %c0_0 = arith.constant 0 : index
    %c0_1 = arith.constant 0 : index
    %25 = vector.load %arg2[%c0, %c0_0, %c0_1] : memref<1x2x128xf32, #tpu.memory_space<vmem>>, vector<1x2x128xf32>
    %26 = vector.shape_cast %24 : vector<2x128xf32> to vector<1x2x128xf32>
    %27 = arith.addf %25, %26 : vector<1x2x128xf32>
    %c0_2 = arith.constant 0 : index
    %c0_3 = arith.constant 0 : index
    %c0_4 = arith.constant 0 : index
    %28 = vector.load %arg3[%c0_2, %c0_3, %c0_4] : memref<1x2x128xf32, #tpu.memory_space<vmem>>, vector<1x2x128xf32>
    tpu.vector_store %arg3[%c0_2, %c0_3, %c0_4], %27 {strides = array<i32>} : memref<1x2x128xf32, #tpu.memory_space<vmem>>, vector<1x2x128xf32>,
    return
  }
  func.func @transform_0(%arg0: i32, %arg1: i32) -> (i32, i32, i32) {
    %c0_i32 = arith.constant 0 : i32
    %c0_i32_0 = arith.constant 0 : i32
    return %arg1, %arg0, %c0_i32 : i32, i32, i32
  }
  func.func @transform_1(%arg0: i32, %arg1: i32) -> (i32, i32, i32) {
    %c0_i32 = arith.constant 0 : i32
    %c0_i32_0 = arith.constant 0 : i32
    return %arg1, %arg0, %c0_i32 : i32, i32, i32
  }
}

module attributes {stable_mosaic.version = 11 : i64} {
  func.func @_add_pe_streamed_kernel(%arg0: i32, %arg1: i32, %arg2: memref<1x2x128xf32, #tpu.memory_space<vmem>>, %arg3: memref<1x2x128xf32, #tpu.memory_space<vmem>>, %arg4: memref<1x2x128xf32, #tpu.memory_space<vmem>>) attributes {dimension_semantics = [#tpu.dimension_semantics<parallel>, #tpu.dimension_semantics<parallel>], iteration_bounds = array<i64: 1, 2>, scalar_prefetch = 0 : i64, scratch_operands = 0 : i64, tpu.core_type = #tpu.core_type<tc>, window_params = [{transform_indices = @transform_0, window_bounds = array<i64: 1, 2, 128>}, {transform_indices = @transform_1, window_bounds = array<i64: 1, 2, 128>}, {transform_indices = @transform_2, window_bounds = array<i64: 1, 2, 128>}]} {
    %c0 = arith.constant 0 : index
    %c0_0 = arith.constant 0 : index
    %c0_1 = arith.constant 0 : index
    %0 = vector.load %arg2[%c0, %c0_0, %c0_1] : memref<1x2x128xf32, #tpu.memory_space<vmem>>, vector<1x2x128xf32>
    %c0_2 = arith.constant 0 : index
    %c0_3 = arith.constant 0 : index
    %c0_4 = arith.constant 0 : index
    %1 = vector.load %arg3[%c0_2, %c0_3, %c0_4] : memref<1x2x128xf32, #tpu.memory_space<vmem>>, vector<1x2x128xf32>
    %2 = arith.addf %0, %1 : vector<1x2x128xf32>
    %c0_5 = arith.constant 0 : index
    %c0_6 = arith.constant 0 : index
    %c0_7 = arith.constant 0 : index
    %3 = vector.load %arg4[%c0_5, %c0_6, %c0_7] : memref<1x2x128xf32, #tpu.memory_space<vmem>>, vector<1x2x128xf32>
    tpu.vector_store %arg4[%c0_5, %c0_6, %c0_7], %2 {strides = array<i32>} : memref<1x2x128xf32, #tpu.memory_space<vmem>>, vector<1x2x128xf32>,
    return
  }
  func.func @transform_0(%arg0: i32, %arg1: i32) -> (i32, i32, i32) {
    %c0_i32 = arith.constant 0 : i32
    %c0_i32_0 = arith.constant 0 : i32
    return %arg1, %arg0, %c0_i32 : i32, i32, i32
  }
  func.func @transform_1(%arg0: i32, %arg1: i32) -> (i32, i32, i32) {
    %c0_i32 = arith.constant 0 : i32
    %c0_i32_0 = arith.constant 0 : i32
    %c0_i32_1 = arith.constant 0 : i32
    return %c0_i32, %arg0, %c0_i32_0 : i32, i32, i32
  }
  func.func @transform_2(%arg0: i32, %arg1: i32) -> (i32, i32, i32) {
    %c0_i32 = arith.constant 0 : i32
    %c0_i32_0 = arith.constant 0 : i32
    return %arg1, %arg0, %c0_i32 : i32, i32, i32
  }
}

</mosaic_0001>

<llo_original>
// kernel: positional_encoding_forward.1
$region0: #{positional_encoding_forward.1}
  #allocation0 [shape = 'u32[]', space=smem, size = 0x4, offset = 0x4, fixed_abs, tag = 'smem constant byte address 0x4 - core index']
  #allocation1 [shape = 'u32[144,128]{1,0:T(1,128)}', space=vmem, size = 0x12000, scoped, tag = 'internal scratch']
  %s0 = inlined_call_operand.vmem [shape: f32[2,2,128], index: 0, kind: input, shape index: {}, may-alias: {0,1}]
  %s1 = inlined_call_operand.vmem [shape: f32[2,2,128], index: 1, kind: output, shape index: {}, may-alias: {0,1}]
  %s2 = sld [smem:[#allocation0]]
  $region37: #{positional_encoding_forward.1} parent=0
    _
  %s4 = ssub.s32 1, %s2
  %s5 = scalar_select 0, %s4, %s2
  loop: start=0, step=1, limit=4
  $region2: #{positional_encoding_forward.1} parent=0 // loop_pre_header
    _
  $region3: #{positional_encoding_forward.1} parent=0 // loop_header
    %s7 = sphi 0, %s11
    %p8 = scmp.ge.s32.totalorder %s7, 4
    %s14 = sphi 0, %s26
    %s15 = sphi 0, %s22
    %s16 = sphi 0, %s14
    %s17 = sphi 0, %s15
    %s18 = sphi 0, %s16
    %s19 = sphi 0, %s17
    %s31 = sphi 0, %s33
    %s34 = sphi 0, %s31
    %s35 = sphi 0, %s34
    %s51 = sphi 0, %s35
    %s59 = sphi 0, %s61
    %s62 = sphi 0, %s59
    %s63 = sphi 0, %s62
    %s79 = sphi 0, %s63
  $region4: #{positional_encoding_forward.1} parent=0 // loop_header_branch
    %10 = sbr.rel (%p8) target = $region8
  $region5: #{positional_encoding_forward.1} parent=0 // loop_body
    %s12 = ssub.s32 %s7, 1
    %s13 = ssub.s32 %s7, 2
    %s20 = sadd.s32 1, %s15
    %p21 = scmp.ge.s32.totalorder %s20, 2
    %s22 = scalar_select %p21, 0, %s20
    %s23 = sadd.s32 1, %s14
    %s24 = scalar_select %p21, %s23, %s14
    %p25 = scmp.ge.s32.totalorder %s24, 1
    %s26 = scalar_select %p25, 0, %s24
    %s27 = ssub.s32 %s15, %s22
    %s28 = ssub.s32 %s14, %s26
    %s29 = sor.u32 %s27, %s28
    %p30 = scmp.eq.s32.totalorder %s29, 0
    %s32 = sadd.s32 %s31, 1
    %s33 = scalar_select %p30, %s31, %s32
    %p36 = pneg %p30
    %p37 = scmp.eq.s32.totalorder %s7, 1
    %p38 = por %p36, %p37
    %p39 = scmp.ne.s32.totalorder %s31, %s34
    %p40 = scmp.eq.s32.totalorder %s7, 0
    %p41 = por %p39, %p40
    %p42 = scmp.ne.s32.totalorder %s31, %s34
    %p43 = scmp.eq.s32.totalorder %s12, 1
    %p44 = por %p42, %p43
    %p45 = scmp.ne.s32.totalorder %s34, %s35
    %p46 = scmp.eq.s32.totalorder %s12, 0
    %p47 = por %p45, %p46
    %p48 = scmp.ne.s32.totalorder %s34, %s35
    %p49 = scmp.eq.s32.totalorder %s13, 1
    %p50 = por %p48, %p49
    %p52 = scmp.ne.s32.totalorder %s35, %s51
    %p53 = scmp.eq.s32.totalorder %s13, 0
    %p54 = por %p52, %p53
    %s55 = ssub.s32 %s15, %s22
    %s56 = ssub.s32 %s14, %s26
    %s57 = sor.u32 %s55, %s56
    %p58 = scmp.eq.s32.totalorder %s57, 0
    %s60 = sadd.s32 %s59, 1
    %s61 = scalar_select %p58, %s59, %s60
    %p64 = pneg %p58
    %p65 = scmp.eq.s32.totalorder %s7, 1
    %p66 = por %p64, %p65
    %p67 = scmp.ne.s32.totalorder %s59, %s62
    %p68 = scmp.eq.s32.totalorder %s7, 0
    %p69 = por %p67, %p68
    %p70 = scmp.ne.s32.totalorder %s59, %s62
    %p71 = scmp.eq.s32.totalorder %s12, 1
    %p72 = por %p70, %p71
    %p73 = scmp.ne.s32.totalorder %s62, %s63
    %p74 = scmp.eq.s32.totalorder %s12, 0
    %p75 = por %p73, %p74
    %p76 = scmp.ne.s32.totalorder %s62, %s63
    %p77 = scmp.eq.s32.totalorder %s13, 1
    %p78 = por %p76, %p77
    %p80 = scmp.ne.s32.totalorder %s63, %s79
    %p81 = scmp.eq.s32.totalorder %s13, 0
    %p82 = por %p80, %p81
    %p83 = scmp.le.s32.totalorder 1, %s7
    %p84 = scmp.lt.s32.totalorder %s7, 3
    %p85 = pnand %p83, %p84
    %p86 = pneg %p85
    // Predicated region
    $region9: #{positional_encoding_forward.1} parent=5 // pred_check
      _
    $region10: #{positional_encoding_forward.1} parent=5 // pred_check_branch
      %88 = sbr.rel (%p85) target = $region12
    $region11: #{positional_encoding_forward.1} parent=5 // pred_region
      %s89 = ssub.s32 %s7, 1
    $region12: #{positional_encoding_forward.1} parent=5 // pred_fallthru
      _
    %p90 = scmp.lt.s32.totalorder %s7, 2
    // Predicated region
    $region13: #{positional_encoding_forward.1} parent=5 // pred_check
      %p91 = pneg %p90
    $region14: #{positional_encoding_forward.1} parent=5 // pred_check_branch
      %93 = sbr.rel (%p91) target = $region16
    $region15: #{positional_encoding_forward.1} parent=5 // pred_region
      // Predicated region
      $region17: #{positional_encoding_forward.1} parent=15 // pred_check
        %p94 = pneg %p41
      $region18: #{positional_encoding_forward.1} parent=15 // pred_check_branch
        %96 = sbr.rel (%p94) target = $region20
      $region19: #{positional_encoding_forward.1} parent=15 // pred_region
        %p97 = scmp.lt.s32.totalorder %s15, 1
        %s98 = scalar_select %p97, %s15, 1
        %p99 = scmp.lt.s32.totalorder %s14, 0
        %s100 = scalar_select %p99, %s14, 0
        %s101 = sadd.s32 %s100, %s98
        %s102 = smul.addr %s101, 2
        %s103 = scalar_lea.vmem %s0, %s102
      $region20: #{positional_encoding_forward.1} parent=15 // pred_fallthru
        _
    $region16: #{positional_encoding_forward.1} parent=5 // pred_fallthru
      _
    %p104 = scmp.le.s32.totalorder 1, %s7
    %p105 = scmp.lt.s32.totalorder %s7, 3
    %p106 = pnand %p104, %p105
    %p107 = pneg %p106
    // Predicated region
    $region21: #{positional_encoding_forward.1} parent=5 // pred_check
      _
    $region22: #{positional_encoding_forward.1} parent=5 // pred_check_branch
      %109 = sbr.rel (%p106) target = $region24
    $region23: #{positional_encoding_forward.1} parent=5 // pred_region
      %s110 = ssub.s32 %s7, 1
      %p111 = scmp.lt.s32.totalorder %s17, 1
      %s112 = scalar_select %p111, %s17, 1
      %p113 = scmp.lt.s32.totalorder %s16, 0
      %s114 = scalar_select %p113, %s16, 0
      %s115 = sadd.s32 %s114, %s112
      %s116 = smul.addr %s115, 2
      %s117 = scalar_lea.vmem %s0, %s116
      %p118 = pneg %p47
      %p119 = pneg %p44
      %p120 = pneg %p75
      %p121 = pneg %p72
      %p122 = scmp.lt.s32.totalorder %s17, 1
      %s123 = scalar_select %p122, %s17, 1
      %p124 = scmp.lt.s32.totalorder %s16, 0
      %s125 = scalar_select %p124, %s16, 0
      %s126 = sadd.s32 %s125, %s123
      %s127 = smul.addr %s126, 2
      %s128 = scalar_lea.vmem %s1, %s127
      %p129 = scmp.lt.s32.totalorder %s17, 1
      %s130 = scalar_select %p129, %s17, 1
      %p131 = scmp.lt.s32.totalorder %s16, 0
      %s132 = scalar_select %p131, %s16, 0
      %s133 = sadd.s32 %s132, %s130
      %s134 = smul.addr %s133, 2
      %s135 = scalar_lea.vmem %s0, %s134
      %p136 = scmp.lt.s32.totalorder %s17, 1
      %s137 = scalar_select %p136, %s17, 1
      %p138 = scmp.lt.s32.totalorder %s16, 0
      %s139 = scalar_select %p138, %s16, 0
      %s140 = sadd.s32 %s139, %s137
      %s141 = smul.addr %s140, 2
      %s142 = scalar_lea.vmem %s1, %s141
      %v143 = vlaneseq
      %v144 = vshrl.u32 %v143, 7
      %v145 = vlaneseq
      %v146 = vand.u32 %v145, 127
      %s147 = smul.u32 %s16, 2
      %v148 = vstv %s147
      %v149 = vadd.s32 %v148, %v144
      %v150 = vmul.u32 %v149, 128
      %v151 = vadd.s32 %v150, %v146
      %v152 = vshra.s32 %v151, 5
      %v153 = vand.u32 %v151, 31
      %v154 = vcvt.s32.f32 %v153
      %v155 = vmul.f32 %v154, -0.28782314
      %v156 = vmul.f32 %v155, 1.442695
      %v157 = vpow.pop %v156
      %v158 = vcvt.s32.f32 %v152
      %v159 = vmul.f32 %v158, %v157
      %v160 = vand.u32 %v153, 1
      %vm161 = vcmp.eq.s32.totalorder %v160, 0
      %v162 = vand.u32 2147483647, %v159
      %vm163 = vcmp.le.f32.partialorder %v162, 0.7853982
      %vm164 = vcmp.lt.s32.totalorder %v159, 0
      %v165 = vand.u32 %v159, 2139095040
      %v166 = vshrl.u32 %v165, 23
      %v167 = vsub.s32 %v166, 127
      %v168 = vand.u32 2147483647, %v159
      %v169 = vand.u32 %v168, 8388607
      %v170 = vor.u32 %v169, 8388608
      %v171 = vsub.s32 0, %v170
      %v172 = vadd.s32 %v167, 1
      %vm173 = vcmp.gt.s32.totalorder %v172, 0
      %v174 = vsel %vm173, %v172, 0
      %v175 = vshrl.u32 %v174, 5
      %v176 = vand.u32 %v174, 31
      %v177 = vsub.s32 32, %v176
      %v178 = vshrl.u32 683565275, %v177
      %v179 = vshll.u32 683565275, %v176
      %v180 = vshrl.u32 2475754826, %v177
      %v181 = vor.u32 %v179, %v180
      %v182 = vshll.u32 2475754826, %v176
      %v183 = vshrl.u32 2131351028, %v177
      %v184 = vor.u32 %v182, %v183
      %v185 = vshll.u32 2131351028, %v176
      %v186 = vshrl.u32 2102212464, %v177
      %v187 = vor.u32 %v185, %v186
      %v188 = vshll.u32 2102212464, %v176
      %v189 = vshrl.u32 920167782, %v177
      %v190 = vor.u32 %v188, %v189
      %v191 = vshll.u32 920167782, %v176
      %v192 = vshrl.u32 1326507024, %v177
      %v193 = vor.u32 %v191, %v192
      %vm194 = vcmp.lt.s32.totalorder %v175, 1
      %vm195 = vcmp.lt.s32.totalorder %v175, 2
      %vm196 = vcmp.lt.s32.totalorder %v175, 3
      %vm197 = vcmp.lt.s32.totalorder %v175, 4
      %v198 = vsel %vm194, %v178, %v181
      %v199 = vsel %vm197, %v187, 2102212464
      %v200 = vsel %vm196, %v184, %v199
      %v201 = vsel %vm195, %v198, %v200
      %v202 = vsel %vm194, %v181, %v184
      %v203 = vsel %vm197, %v190, 920167782
      %v204 = vsel %vm196, %v187, %v203
      %v205 = vsel %vm195, %v202, %v204
      %v206 = vsel %vm194, %v184, %v187
      %v207 = vsel %vm197, %v193, 1326507024
      %v208 = vsel %vm196, %v190, %v207
      %v209 = vsel %vm195, %v206, %v208
      %v210 = vshll.u32 %v170, 8
      %v211 = vmul.u32.u64.compose %v210, %v209
      %v212 = vextract.low.u32 %v211
      %v213 = vextract.high.u32 %v211
      %v214 = vmul.u32.u64.compose %v210, %v205
      %v215 = vextract.low.u32 %v214
      %v216 = vextract.high.u32 %v214
      %v217 = vmul.u32 %v210, %v201
      %v218 = vadd.s32 %v213, %v215
      %vm219 = vc.u32 %v213, %v215
      %v220 = vadd.s32 %v216, 1
      %v221 = vsel %vm219, %v220, %v216
      %v222 = vadd.s32 %v217, %v221
      %v223 = vadd.s32 %v222, 536870912
      %v224 = vshrl.u32 %v223, 30
      %v225 = vshll.u32 %v224, 30
      %v226 = vsub.s32 %v222, %v225
      %vm227 = vcmp.lt.s32.totalorder %v226, 0
      %v228 = vsub.s32 0, %v226
      %v229 = vsel %vm227, %v228, %v226
      %v230 = vclz %v229
      %v231 = vsub.s32 %v230, 2
      %vm232 = vcmp.gt.s32.totalorder 0, %v231
      %v233 = vsel %vm232, 0, %v231
      %v234 = vsub.s32 32, %v233
      %v235 = vshll.u32 %v226, %v233
      %v236 = vshrl.u32 %v218, %v234
      %v237 = vor.u32 %v235, %v236
      %v238 = vsub.s32 4294967266, %v233
      %v239 = vadd.s32 %v238, 127
      %v240 = vshll.u32 %v239, 23
      %v241 = vor.u32 4788187, %v240
      %v242 = vand.u32 2147483647, %v241
      %v244 = vcvt.s32.f32 %v237
      %v245 = vmul.f32 %v244, %v242
      %v246 = vxor.u32 %v245, 2147483648
      %v247 = vsel %vm164, %v246, %v245
      %v248 = vsub.s32 4, %v224
      %v249 = vsel %vm164, %v248, %v224
      %v250 = vsel %vm163, %v159, %v247
      %v251 = vsel %vm163, 0, %v249
      %v252 = vcosq.f32.pop %v250
      %v253 = vsinq.f32.pop %v250
      %vm254 = vweird.f32 %v159
      %v255 = vadd.s32 %v251, 3
      %v256 = vand.u32 %v255, 3
      %vm257 = vcmp.lt.s32.totalorder %v256, 2
      %vm258 = vcmp.eq.s32.totalorder %v256, 0
      %v259 = vxor.u32 %v253, 2147483648
      %v260 = vsel %vm258, %v252, %v259
      %vm261 = vcmp.eq.s32.totalorder %v256, 2
      %v262 = vxor.u32 %v252, 2147483648
      %v263 = vsel %vm261, %v262, %v253
      %v264 = vsel %vm257, %v260, %v263
      %v265 = vsel %vm254, nan, %v264
      %v266 = vand.u32 2147483647, %v159
      %vm267 = vcmp.le.f32.partialorder %v266, 0.7853982
      %vm268 = vcmp.lt.s32.totalorder %v159, 0
      %v269 = vand.u32 %v159, 2139095040
      %v270 = vshrl.u32 %v269, 23
      %v271 = vsub.s32 %v270, 127
      %v272 = vand.u32 2147483647, %v159
      %v273 = vand.u32 %v272, 8388607
      %v274 = vor.u32 %v273, 8388608
      %v275 = vsub.s32 0, %v274
      %v276 = vadd.s32 %v271, 1
      %vm277 = vcmp.gt.s32.totalorder %v276, 0
      %v278 = vsel %vm277, %v276, 0
      %v279 = vshrl.u32 %v278, 5
      %v280 = vand.u32 %v278, 31
      %v281 = vsub.s32 32, %v280
      %v282 = vshrl.u32 683565275, %v281
      %v283 = vshll.u32 683565275, %v280
      %v284 = vshrl.u32 2475754826, %v281
      %v285 = vor.u32 %v283, %v284
      %v286 = vshll.u32 2475754826, %v280
      %v287 = vshrl.u32 2131351028, %v281
      %v288 = vor.u32 %v286, %v287
      %v289 = vshll.u32 2131351028, %v280
      %v290 = vshrl.u32 2102212464, %v281
      %v291 = vor.u32 %v289, %v290
      %v292 = vshll.u32 2102212464, %v280
      %v293 = vshrl.u32 920167782, %v281
      %v294 = vor.u32 %v292, %v293
      %v295 = vshll.u32 920167782, %v280
      %v296 = vshrl.u32 1326507024, %v281
      %v297 = vor.u32 %v295, %v296
      %vm298 = vcmp.lt.s32.totalorder %v279, 1
      %vm299 = vcmp.lt.s32.totalorder %v279, 2
      %vm300 = vcmp.lt.s32.totalorder %v279, 3
      %vm301 = vcmp.lt.s32.totalorder %v279, 4
      %v302 = vsel %vm298, %v282, %v285
      %v303 = vsel %vm301, %v291, 2102212464
      %v304 = vsel %vm300, %v288, %v303
      %v305 = vsel %vm299, %v302, %v304
      %v306 = vsel %vm298, %v285, %v288
      %v307 = vsel %vm301, %v294, 920167782
      %v308 = vsel %vm300, %v291, %v307
      %v309 = vsel %vm299, %v306, %v308
      %v310 = vsel %vm298, %v288, %v291
      %v311 = vsel %vm301, %v297, 1326507024
      %v312 = vsel %vm300, %v294, %v311
      %v313 = vsel %vm299, %v310, %v312
      %v314 = vshll.u32 %v274, 8
      %v315 = vmul.u32.u64.compose %v314, %v313
      %v316 = vextract.low.u32 %v315
      %v317 = vextract.high.u32 %v315
      %v318 = vmul.u32.u64.compose %v314, %v309
      %v319 = vextract.low.u32 %v318
      %v320 = vextract.high.u32 %v318
      %v321 = vmul.u32 %v314, %v305
      %v322 = vadd.s32 %v317, %v319
      %vm323 = vc.u32 %v317, %v319
      %v324 = vadd.s32 %v320, 1
      %v325 = vsel %vm323, %v324, %v320
      %v326 = vadd.s32 %v321, %v325
      %v327 = vadd.s32 %v326, 536870912
      %v328 = vshrl.u32 %v327, 30
      %v329 = vshll.u32 %v328, 30
      %v330 = vsub.s32 %v326, %v329
      %vm331 = vcmp.lt.s32.totalorder %v330, 0
      %v332 = vsub.s32 0, %v330
      %v333 = vsel %vm331, %v332, %v330
      %v334 = vclz %v333
      %v335 = vsub.s32 %v334, 2
      %vm336 = vcmp.gt.s32.totalorder 0, %v335
      %v337 = vsel %vm336, 0, %v335
      %v338 = vsub.s32 32, %v337
      %v339 = vshll.u32 %v330, %v337
      %v340 = vshrl.u32 %v322, %v338
      %v341 = vor.u32 %v339, %v340
      %v342 = vsub.s32 4294967266, %v337
      %v343 = vadd.s32 %v342, 127
      %v344 = vshll.u32 %v343, 23
      %v345 = vor.u32 4788187, %v344
      %v346 = vand.u32 2147483647, %v345
      %v348 = vcvt.s32.f32 %v341
      %v349 = vmul.f32 %v348, %v346
      %v350 = vxor.u32 %v349, 2147483648
      %v351 = vsel %vm268, %v350, %v349
      %v352 = vsub.s32 4, %v328
      %v353 = vsel %vm268, %v352, %v328
      %v354 = vsel %vm267, %v159, %v351
      %v355 = vsel %vm267, 0, %v353
      %v356 = vcosq.f32.pop %v354
      %v357 = vsinq.f32.pop %v354
      %vm358 = vweird.f32 %v159
      %v359 = vand.u32 %v355, 3
      %vm360 = vcmp.lt.s32.totalorder %v359, 2
      %vm361 = vcmp.eq.s32.totalorder %v359, 0
      %v362 = vxor.u32 %v357, 2147483648
      %v363 = vsel %vm361, %v356, %v362
      %vm364 = vcmp.eq.s32.totalorder %v359, 2
      %v365 = vxor.u32 %v356, 2147483648
      %v366 = vsel %vm364, %v365, %v357
      %v367 = vsel %vm360, %v363, %v366
      %v368 = vsel %vm358, nan, %v367
      %v369 = vsel %vm161, %v265, %v368
      %v370 = vld [vmem:[%s135] sm:$0x3]
      %v371 = vadd.f32 %v370, %v369
      %372 = vst [vmem:[%s142] sm:$0x3] %v371
      %p373 = scmp.lt.s32.totalorder %s17, 1
      %s374 = scalar_select %p373, %s17, 1
      %p375 = scmp.lt.s32.totalorder %s16, 0
      %s376 = scalar_select %p375, %s16, 0
      %s377 = sadd.s32 %s376, %s374
      %s378 = smul.addr %s377, 2
      %s379 = scalar_lea.vmem %s1, %s378
      // Predicated region
      $region25: #{positional_encoding_forward.1} parent=23 // pred_check
        %p380 = pneg %p72
      $region26: #{positional_encoding_forward.1} parent=23 // pred_check_branch
        %382 = sbr.rel (%p380) target = $region28
      $region27: #{positional_encoding_forward.1} parent=23 // pred_region
        _
      $region28: #{positional_encoding_forward.1} parent=23 // pred_fallthru
        _
    $region24: #{positional_encoding_forward.1} parent=5 // pred_fallthru
      _
    %p383 = scmp.le.s32.totalorder 2, %s7
    // Predicated region
    $region29: #{positional_encoding_forward.1} parent=5 // pred_check
      %p384 = pneg %p383
    $region30: #{positional_encoding_forward.1} parent=5 // pred_check_branch
      %386 = sbr.rel (%p384) target = $region32
    $region31: #{positional_encoding_forward.1} parent=5 // pred_region
      %s387 = ssub.s32 %s7, 2
      // Predicated region
      $region33: #{positional_encoding_forward.1} parent=31 // pred_check
        %p388 = pneg %p78
      $region34: #{positional_encoding_forward.1} parent=31 // pred_check_branch
        %390 = sbr.rel (%p388) target = $region36
      $region35: #{positional_encoding_forward.1} parent=31 // pred_region
        %p391 = scmp.lt.s32.totalorder %s19, 1
        %s392 = scalar_select %p391, %s19, 1
        %p393 = scmp.lt.s32.totalorder %s18, 0
        %s394 = scalar_select %p393, %s18, 0
        %s395 = sadd.s32 %s394, %s392
        %s396 = smul.addr %s395, 2
        %s397 = scalar_lea.vmem %s1, %s396
      $region36: #{positional_encoding_forward.1} parent=31 // pred_fallthru
        _
    $region32: #{positional_encoding_forward.1} parent=5 // pred_fallthru
      _
  $region6: #{positional_encoding_forward.1} parent=0 // loop_footer
    %s11 = sadd.s32 1, %s7
  $region7: #{positional_encoding_forward.1} parent=0 // loop_footer_branch
    %6 = sbr.rel target = $region3
  $region8: #{positional_encoding_forward.1} parent=0 // loop_exit
    _

// kernel: positional_encoding_forward.1
$region0: #{positional_encoding_forward.1}
  #allocation0 [shape = 'u32[]', space=smem, size = 0x4, offset = 0x4, fixed_abs, tag = 'smem constant byte address 0x4 - core index']
  #allocation1 [shape = 'u32[144,128]{1,0:T(1,128)}', space=vmem, size = 0x12000, scoped, tag = 'internal scratch']
  %s0 = inlined_call_operand.vmem [shape: f32[2,2,128], index: 0, kind: input, shape index: {}, may-alias: {0,2}]
  %s1 = inlined_call_operand.vmem [shape: f32[1,2,128], index: 1, kind: input, shape index: {}]
  %s2 = inlined_call_operand.vmem [shape: f32[2,2,128], index: 2, kind: output, shape index: {}, may-alias: {0,2}]
  %s3 = sld [smem:[#allocation0]]
  $region41: #{positional_encoding_forward.1} parent=0
    _
  %s5 = ssub.s32 1, %s3
  %s6 = scalar_select 0, %s5, %s3
  loop: start=0, step=1, limit=4
  $region2: #{positional_encoding_forward.1} parent=0 // loop_pre_header
    _
  $region3: #{positional_encoding_forward.1} parent=0 // loop_header
    %s8 = sphi 0, %s12
    %p9 = scmp.ge.s32.totalorder %s8, 4
    %s15 = sphi 0, %s27
    %s16 = sphi 0, %s23
    %s17 = sphi 0, %s15
    %s18 = sphi 0, %s16
    %s19 = sphi 0, %s17
    %s20 = sphi 0, %s18
    %s32 = sphi 0, %s34
    %s35 = sphi 0, %s32
    %s36 = sphi 0, %s35
    %s52 = sphi 0, %s36
    %s58 = sphi 0, %s60
    %s61 = sphi 0, %s58
    %s62 = sphi 0, %s61
    %s78 = sphi 0, %s62
    %s86 = sphi 0, %s88
    %s89 = sphi 0, %s86
    %s90 = sphi 0, %s89
    %s106 = sphi 0, %s90
  $region4: #{positional_encoding_forward.1} parent=0 // loop_header_branch
    %11 = sbr.rel (%p9) target = $region8
  $region5: #{positional_encoding_forward.1} parent=0 // loop_body
    %s13 = ssub.s32 %s8, 1
    %s14 = ssub.s32 %s8, 2
    %s21 = sadd.s32 1, %s16
    %p22 = scmp.ge.s32.totalorder %s21, 2
    %s23 = scalar_select %p22, 0, %s21
    %s24 = sadd.s32 1, %s15
    %s25 = scalar_select %p22, %s24, %s15
    %p26 = scmp.ge.s32.totalorder %s25, 1
    %s27 = scalar_select %p26, 0, %s25
    %s28 = ssub.s32 %s16, %s23
    %s29 = ssub.s32 %s15, %s27
    %s30 = sor.u32 %s28, %s29
    %p31 = scmp.eq.s32.totalorder %s30, 0
    %s33 = sadd.s32 %s32, 1
    %s34 = scalar_select %p31, %s32, %s33
    %p37 = pneg %p31
    %p38 = scmp.eq.s32.totalorder %s8, 1
    %p39 = por %p37, %p38
    %p40 = scmp.ne.s32.totalorder %s32, %s35
    %p41 = scmp.eq.s32.totalorder %s8, 0
    %p42 = por %p40, %p41
    %p43 = scmp.ne.s32.totalorder %s32, %s35
    %p44 = scmp.eq.s32.totalorder %s13, 1
    %p45 = por %p43, %p44
    %p46 = scmp.ne.s32.totalorder %s35, %s36
    %p47 = scmp.eq.s32.totalorder %s13, 0
    %p48 = por %p46, %p47
    %p49 = scmp.ne.s32.totalorder %s35, %s36
    %p50 = scmp.eq.s32.totalorder %s14, 1
    %p51 = por %p49, %p50
    %p53 = scmp.ne.s32.totalorder %s36, %s52
    %p54 = scmp.eq.s32.totalorder %s14, 0
    %p55 = por %p53, %p54
    %s56 = ssub.s32 %s15, %s27
    %p57 = scmp.eq.s32.totalorder %s56, 0
    %s59 = sadd.s32 %s58, 1
    %s60 = scalar_select %p57, %s58, %s59
    %p63 = pneg %p57
    %p64 = scmp.eq.s32.totalorder %s8, 1
    %p65 = por %p63, %p64
    %p66 = scmp.ne.s32.totalorder %s58, %s61
    %p67 = scmp.eq.s32.totalorder %s8, 0
    %p68 = por %p66, %p67
    %p69 = scmp.ne.s32.totalorder %s58, %s61
    %p70 = scmp.eq.s32.totalorder %s13, 1
    %p71 = por %p69, %p70
    %p72 = scmp.ne.s32.totalorder %s61, %s62
    %p73 = scmp.eq.s32.totalorder %s13, 0
    %p74 = por %p72, %p73
    %p75 = scmp.ne.s32.totalorder %s61, %s62
    %p76 = scmp.eq.s32.totalorder %s14, 1
    %p77 = por %p75, %p76
    %p79 = scmp.ne.s32.totalorder %s62, %s78
    %p80 = scmp.eq.s32.totalorder %s14, 0
    %p81 = por %p79, %p80
    %s82 = ssub.s32 %s16, %s23
    %s83 = ssub.s32 %s15, %s27
    %s84 = sor.u32 %s82, %s83
    %p85 = scmp.eq.s32.totalorder %s84, 0
    %s87 = sadd.s32 %s86, 1
    %s88 = scalar_select %p85, %s86, %s87
    %p91 = pneg %p85
    %p92 = scmp.eq.s32.totalorder %s8, 1
    %p93 = por %p91, %p92
    %p94 = scmp.ne.s32.totalorder %s86, %s89
    %p95 = scmp.eq.s32.totalorder %s8, 0
    %p96 = por %p94, %p95
    %p97 = scmp.ne.s32.totalorder %s86, %s89
    %p98 = scmp.eq.s32.totalorder %s13, 1
    %p99 = por %p97, %p98
    %p100 = scmp.ne.s32.totalorder %s89, %s90
    %p101 = scmp.eq.s32.totalorder %s13, 0
    %p102 = por %p100, %p101
    %p103 = scmp.ne.s32.totalorder %s89, %s90
    %p104 = scmp.eq.s32.totalorder %s14, 1
    %p105 = por %p103, %p104
    %p107 = scmp.ne.s32.totalorder %s90, %s106
    %p108 = scmp.eq.s32.totalorder %s14, 0
    %p109 = por %p107, %p108
    %p110 = scmp.le.s32.totalorder 1, %s8
    %p111 = scmp.lt.s32.totalorder %s8, 3
    %p112 = pnand %p110, %p111
    %p113 = pneg %p112
    // Predicated region
    $region9: #{positional_encoding_forward.1} parent=5 // pred_check
      _
    $region10: #{positional_encoding_forward.1} parent=5 // pred_check_branch
      %115 = sbr.rel (%p112) target = $region12
    $region11: #{positional_encoding_forward.1} parent=5 // pred_region
      %s116 = ssub.s32 %s8, 1
      // Predicated region
      $region13: #{positional_encoding_forward.1} parent=11 // pred_check
        %p117 = pneg %p74
      $region14: #{positional_encoding_forward.1} parent=11 // pred_check_branch
        %119 = sbr.rel (%p117) target = $region16
      $region15: #{positional_encoding_forward.1} parent=11 // pred_region
        %p120 = scmp.lt.s32.totalorder %s17, 0
        %s121 = scalar_select %p120, %s17, 0
        %s122 = smul.addr %s121, 2
        %s123 = scalar_lea.vmem %s1, %s122
      $region16: #{positional_encoding_forward.1} parent=11 // pred_fallthru
        _
    $region12: #{positional_encoding_forward.1} parent=5 // pred_fallthru
      _
    %p124 = scmp.lt.s32.totalorder %s8, 2
    // Predicated region
    $region17: #{positional_encoding_forward.1} parent=5 // pred_check
      %p125 = pneg %p124
    $region18: #{positional_encoding_forward.1} parent=5 // pred_check_branch
      %127 = sbr.rel (%p125) target = $region20
    $region19: #{positional_encoding_forward.1} parent=5 // pred_region
      // Predicated region
      $region21: #{positional_encoding_forward.1} parent=19 // pred_check
        %p128 = pneg %p42
      $region22: #{positional_encoding_forward.1} parent=19 // pred_check_branch
        %130 = sbr.rel (%p128) target = $region24
      $region23: #{positional_encoding_forward.1} parent=19 // pred_region
        %p131 = scmp.lt.s32.totalorder %s16, 1
        %s132 = scalar_select %p131, %s16, 1
        %p133 = scmp.lt.s32.totalorder %s15, 0
        %s134 = scalar_select %p133, %s15, 0
        %s135 = sadd.s32 %s134, %s132
        %s136 = smul.addr %s135, 2
        %s137 = scalar_lea.vmem %s0, %s136
      $region24: #{positional_encoding_forward.1} parent=19 // pred_fallthru
        _
    $region20: #{positional_encoding_forward.1} parent=5 // pred_fallthru
      _
    %p138 = scmp.le.s32.totalorder 1, %s8
    %p139 = scmp.lt.s32.totalorder %s8, 3
    %p140 = pnand %p138, %p139
    %p141 = pneg %p140
    // Predicated region
    $region25: #{positional_encoding_forward.1} parent=5 // pred_check
      _
    $region26: #{positional_encoding_forward.1} parent=5 // pred_check_branch
      %143 = sbr.rel (%p140) target = $region28
    $region27: #{positional_encoding_forward.1} parent=5 // pred_region
      %s144 = ssub.s32 %s8, 1
      %p145 = scmp.lt.s32.totalorder %s18, 1
      %s146 = scalar_select %p145, %s18, 1
      %p147 = scmp.lt.s32.totalorder %s17, 0
      %s148 = scalar_select %p147, %s17, 0
      %s149 = sadd.s32 %s148, %s146
      %s150 = smul.addr %s149, 2
      %s151 = scalar_lea.vmem %s0, %s150
      %p152 = pneg %p48
      %p153 = pneg %p45
      %p154 = scmp.lt.s32.totalorder %s17, 0
      %s155 = scalar_select %p154, %s17, 0
      %s156 = smul.addr %s155, 2
      %s157 = scalar_lea.vmem %s1, %s156
      %p158 = pneg %p74
      %p159 = pneg %p71
      %p160 = pneg %p102
      %p161 = pneg %p99
      %p162 = scmp.lt.s32.totalorder %s18, 1
      %s163 = scalar_select %p162, %s18, 1
      %p164 = scmp.lt.s32.totalorder %s17, 0
      %s165 = scalar_select %p164, %s17, 0
      %s166 = sadd.s32 %s165, %s163
      %s167 = smul.addr %s166, 2
      %s168 = scalar_lea.vmem %s2, %s167
      %p169 = scmp.lt.s32.totalorder %s18, 1
      %s170 = scalar_select %p169, %s18, 1
      %p171 = scmp.lt.s32.totalorder %s17, 0
      %s172 = scalar_select %p171, %s17, 0
      %s173 = sadd.s32 %s172, %s170
      %s174 = smul.addr %s173, 2
      %s175 = scalar_lea.vmem %s0, %s174
      %p176 = scmp.lt.s32.totalorder %s17, 0
      %s177 = scalar_select %p176, %s17, 0
      %s178 = smul.addr %s177, 2
      %s179 = scalar_lea.vmem %s1, %s178
      %p180 = scmp.lt.s32.totalorder %s18, 1
      %s181 = scalar_select %p180, %s18, 1
      %p182 = scmp.lt.s32.totalorder %s17, 0
      %s183 = scalar_select %p182, %s17, 0
      %s184 = sadd.s32 %s183, %s181
      %s185 = smul.addr %s184, 2
      %s186 = scalar_lea.vmem %s2, %s185
      %v187 = vld [vmem:[%s175] sm:$0x3]
      %v188 = vld [vmem:[%s179] sm:$0x3]
      %v189 = vadd.f32 %v187, %v188
      %190 = vst [vmem:[%s186] sm:$0x3] %v189
      %p191 = scmp.lt.s32.totalorder %s18, 1
      %s192 = scalar_select %p191, %s18, 1
      %p193 = scmp.lt.s32.totalorder %s17, 0
      %s194 = scalar_select %p193, %s17, 0
      %s195 = sadd.s32 %s194, %s192
      %s196 = smul.addr %s195, 2
      %s197 = scalar_lea.vmem %s2, %s196
      // Predicated region
      $region29: #{positional_encoding_forward.1} parent=27 // pred_check
        %p198 = pneg %p99
      $region30: #{positional_encoding_forward.1} parent=27 // pred_check_branch
        %200 = sbr.rel (%p198) target = $region32
      $region31: #{positional_encoding_forward.1} parent=27 // pred_region
        _
      $region32: #{positional_encoding_forward.1} parent=27 // pred_fallthru
        _
    $region28: #{positional_encoding_forward.1} parent=5 // pred_fallthru
      _
    %p201 = scmp.le.s32.totalorder 2, %s8
    // Predicated region
    $region33: #{positional_encoding_forward.1} parent=5 // pred_check
      %p202 = pneg %p201
    $region34: #{positional_encoding_forward.1} parent=5 // pred_check_branch
      %204 = sbr.rel (%p202) target = $region36
    $region35: #{positional_encoding_forward.1} parent=5 // pred_region
      %s205 = ssub.s32 %s8, 2
      // Predicated region
      $region37: #{positional_encoding_forward.1} parent=35 // pred_check
        %p206 = pneg %p105
      $region38: #{positional_encoding_forward.1} parent=35 // pred_check_branch
        %208 = sbr.rel (%p206) target = $region40
      $region39: #{positional_encoding_forward.1} parent=35 // pred_region
        %p209 = scmp.lt.s32.totalorder %s20, 1
        %s210 = scalar_select %p209, %s20, 1
        %p211 = scmp.lt.s32.totalorder %s19, 0
        %s212 = scalar_select %p211, %s19, 0
        %s213 = sadd.s32 %s212, %s210
        %s214 = smul.addr %s213, 2
        %s215 = scalar_lea.vmem %s2, %s214
      $region40: #{positional_encoding_forward.1} parent=35 // pred_fallthru
        _
    $region36: #{positional_encoding_forward.1} parent=5 // pred_fallthru
      _
  $region6: #{positional_encoding_forward.1} parent=0 // loop_footer
    %s12 = sadd.s32 1, %s8
  $region7: #{positional_encoding_forward.1} parent=0 // loop_footer_branch
    %7 = sbr.rel target = $region3
  $region8: #{positional_encoding_forward.1} parent=0 // loop_exit
    _

</llo_original>
